<compile_context>
chip_gen: v7x
topology: tpu7x:2x2x1
jax: 0.10.0
libtpu: 0.0.40
codegen_flags: <defaults>
</compile_context>

<pallas_src>
from typing import NamedTuple

import jax
import jax.numpy as jnp
from jax.experimental import pallas as pl
from jax.experimental.pallas import tpu as pltpu


def _round_up(x: int, m: int) -> int:
    return (x + m - 1) // m * m


def _cdiv(a: int, b: int) -> int:
    return (a + b - 1) // b


def _pick_tile(dim_padded: int, tmax: int) -> int:
    """Largest multiple of 128 that divides dim_padded (a multiple of 128)
    and is <= tmax. Falls back to 128."""
    best = 128
    blocks = dim_padded // 128
    for m in range(1, blocks + 1):
        if blocks % m == 0 and m * 128 <= tmax:
            best = m * 128
    return best


# ----------------------------------------------------------------------------
# Kernels
# ----------------------------------------------------------------------------
def _sigmoid(z):
    # sigmoid(z) == 0.5 * tanh(0.5 * z) + 0.5 : one EUP op, no exp/recip pair,
    # saturates cleanly for large |z|.
    return 0.5 * jnp.tanh(0.5 * z) + 0.5


def _logreg_kernel_single_k(x_ref, w_ref, b_ref, o_ref):
    # Whole reduction (K = In) fits in one block.
    z = jnp.dot(x_ref[...], w_ref[...], preferred_element_type=jnp.float32)
    z = z + b_ref[...]
    o_ref[...] = _sigmoid(z).astype(o_ref.dtype)


def _logreg_kernel_k_tiled(x_ref, w_ref, b_ref, o_ref, acc_ref):
    # Grid = (batch, out, in); K axis last and "arbitrary".
    k = pl.program_id(2)

    @pl.when(k == 0)
    def _():
        acc_ref[...] = jnp.zeros_like(acc_ref)

    acc_ref[...] += jnp.dot(x_ref[...], w_ref[...],
                            preferred_element_type=jnp.float32)

    @pl.when(k == pl.num_programs(2) - 1)
    def _():
        z = acc_ref[...] + b_ref[...]
        o_ref[...] = _sigmoid(z).astype(o_ref.dtype)


# ----------------------------------------------------------------------------
# Parameter preparation (hoisted out of the per-call path)
# ----------------------------------------------------------------------------
class LogRegParams(NamedTuple):
    w_t: jax.Array        # (In_p, Out_p) compute_dtype, pre-transposed + padded
    b_p: jax.Array        # (1, Out_p) float32, padded
    in_features: int
    out_features: int
    in_padded: int
    out_padded: int
    tk: int
    tn: int


def prepare_logistic_reg_params(weight, bias, *,
                                compute_dtype=jnp.bfloat16,
                                tn_max: int = 512,
                                tk_max: int = 1024) -> LogRegParams:
    """One-time layout plumbing: transpose to (In, Out), pad Out to a
    lane-dense multiple of 128 (and In to a multiple of the K tile when K
    tiling is needed), cast to the compute dtype."""
    out_f, in_f = weight.shape
    assert bias.shape == (out_f,)

    out_p = _round_up(out_f, 128)
    tn = out_p if out_p <= tn_max else _pick_tile(out_p, tn_max)

    if in_f <= tk_max:
        in_p, tk = in_f, in_f                  # single K block, no K padding
    else:
        in_p = _round_up(in_f, 128)
        tk = _pick_tile(in_p, tk_max)

    w_t = jnp.zeros((in_p, out_p), compute_dtype)
    w_t = w_t.at[:in_f, :out_f].set(weight.T.astype(compute_dtype))
    b_p = jnp.zeros((1, out_p), jnp.float32)
    b_p = b_p.at[:, :out_f].set(bias.astype(jnp.float32))
    return LogRegParams(w_t, b_p, in_f, out_f, in_p, out_p, tk, tn)


# ----------------------------------------------------------------------------
# Forward pass
# ----------------------------------------------------------------------------
def logistic_reg_apply(x, params: LogRegParams, *,
                       tb_max: int = 1024,
                       vmem_budget_bytes: int = 32 * 1024 * 1024):
    """x: (B, In) -> sigmoid(x @ W.T + b): (B, Out), float32."""
    b_sz, in_f = x.shape
    assert in_f == params.in_features

    in_p, out_p = params.in_padded, params.out_padded
    tk, tn = params.tk, params.tn
    nk = in_p // tk
    nj = out_p // tn
    cdt = params.w_t.dtype
    itemsize = jnp.dtype(cdt).itemsize

    # Batch tile sized from a VMEM budget that counts the default
    # double-buffering of every streamed operand plus the f32 accumulator.
    # ~32 MiB budget keeps v7x (64 MiB/TC) comfortable; v5e/v6e have headroom.
    fixed = 2 * tk * tn * itemsize + 2 * tn * 4            # weight + bias bufs
    per_row = 2 * tk * itemsize + 2 * tn * 4 + tn * 4      # x + out bufs + acc
    tb_cap = max(16, (vmem_budget_bytes - fixed) // per_row)
    tb_cap = max(16, min(tb_max, (tb_cap // 16) * 16))

    nb = max(1, _cdiv(b_sz, tb_cap))
    tb = _round_up(_cdiv(b_sz, nb), 16)        # minimal batch padding, bf16-packed
    b_pad = nb * tb

    x_p = x.astype(cdt)
    if (b_pad, in_p) != (b_sz, in_f):
        x_p = jnp.pad(x_p, ((0, b_pad - b_sz), (0, in_p - in_f)))

    footprint = fixed + tb * per_row
    vmem_limit = int(min(max(int(1.5 * footprint), 16 * 1024 * 1024),
                         48 * 1024 * 1024))

    cost = pl.CostEstimate(
        flops=2 * b_pad * in_p * out_p,
        transcendentals=b_pad * out_p,
        bytes_accessed=(b_pad * in_p * itemsize + in_p * out_p * itemsize
                        + 4 * b_pad * out_p + 4 * out_p),
    )

    if nk == 1:
        grid = (nb, nj)
        in_specs = [
            pl.BlockSpec((tb, in_p), lambda i, j: (i, 0)),   # x: streamed over B
            pl.BlockSpec((in_p, tn), lambda i, j: (0, j)),   # weight column block
            pl.BlockSpec((1, tn), lambda i, j: (0, j)),      # bias
        ]
        out_spec = pl.BlockSpec((tb, tn), lambda i, j: (i, j))
        scratch = []
        kernel = _logreg_kernel_single_k
        dims = ("parallel", "parallel")
    else:
        grid = (nb, nj, nk)                                  # K last, "arbitrary"
        in_specs = [
            pl.BlockSpec((tb, tk), lambda i, j, k: (i, k)),
            pl.BlockSpec((tk, tn), lambda i, j, k: (k, j)),
            pl.BlockSpec((1, tn), lambda i, j, k: (0, j)),
        ]
        out_spec = pl.BlockSpec((tb, tn), lambda i, j, k: (i, j))
        scratch = [pltpu.VMEM((tb, tn), jnp.float32)]
        kernel = _logreg_kernel_k_tiled
        dims = ("parallel", "parallel", "arbitrary")

    out_padded = pl.pallas_call(
        kernel,
        out_shape=jax.ShapeDtypeStruct((b_pad, out_p), jnp.float32),
        grid=grid,
        in_specs=in_specs,
        out_specs=out_spec,
        scratch_shapes=scratch,
        compiler_params=pltpu.CompilerParams(
            dimension_semantics=dims,
            vmem_limit_bytes=vmem_limit,
        ),
        cost_estimate=cost,
    )(x_p, params.w_t, params.b_p)

    return out_padded[:b_sz, :params.out_features]


def logistic_reg(x, weight, bias, *, compute_dtype=jnp.bfloat16,
                 allow_xla_fallback: bool = False, **apply_kwargs):
    """Convenience wrapper matching the torch module: sigmoid(Linear(x))."""
    if allow_xla_fallback and x.shape[0] * weight.shape[0] * weight.shape[1] < (1 << 16):
        # For tiny shapes XLA fusion beats the pallas_call fixed overhead.
        return jax.nn.sigmoid(x @ weight.T + bias)
    params = prepare_logistic_reg_params(weight, bias, compute_dtype=compute_dtype)
    return logistic_reg_apply(x, params, **apply_kwargs)


def logistic_reg_ref(x, weight, bias):
    return jax.nn.sigmoid(x @ weight.T + bias)


if __name__ == "__main__":
    key = jax.random.PRNGKey(0)
    kx, kw, kb, kx2, kw2, kb2 = jax.random.split(key, 6)

    # ---- Case 1: shapes implied by the module (small): batch=8, in=32, out=4
    batch, in_features, out_features = 8, 32, 4
    x = jax.random.normal(kx, (batch, in_features), dtype=jnp.float32)
    bound = 1.0 / float(jnp.sqrt(in_features))
    weight = jax.random.uniform(kw, (out_features, in_features),
                                minval=-bound, maxval=bound, dtype=jnp.float32)
    bias = jax.random.uniform(kb, (out_features,),
                              minval=-bound, maxval=bound, dtype=jnp.float32)

    # Parameter prep hoisted out of the per-call path (done once).
    params = prepare_logistic_reg_params(weight, bias)          # bf16 datapath
    out = jax.block_until_ready(logistic_reg_apply(x, params))
    assert out.shape == (batch, out_features)

    # Tight check against a reference using the same bf16 input quantization.
    xq = x.astype(jnp.bfloat16).astype(jnp.float32)
    wq = weight.astype(jnp.bfloat16).astype(jnp.float32)
    assert jnp.allclose(out, logistic_reg_ref(xq, wq, bias), atol=1e-4, rtol=1e-4)
    # Against the pure-f32 reference the only error is bf16 input quantization.
    assert jnp.allclose(out, logistic_reg_ref(x, weight, bias), atol=3e-2, rtol=3e-2)

    # f32 compute path: matches the f32 reference tightly.
    params_f32 = prepare_logistic_reg_params(weight, bias,
                                             compute_dtype=jnp.float32)
    out_f32 = jax.block_until_ready(logistic_reg_apply(x, params_f32))
    assert jnp.allclose(out_f32, logistic_reg_ref(x, weight, bias),
                        atol=1e-5, rtol=1e-5)

    # ---- Case 2: exercise the K-tiled accumulator + N-tiled path.
    B2, In2, Out2 = 40, 256, 192
    x2 = jax.random.normal(kx2, (B2, In2), dtype=jnp.float32)
    w2 = jax.random.uniform(kw2, (Out2, In2), minval=-0.1, maxval=0.1,
                            dtype=jnp.float32)
    b2 = jax.random.uniform(kb2, (Out2,), minval=-0.1, maxval=0.1,
                            dtype=jnp.float32)
    params2 = prepare_logistic_reg_params(w2, b2, tn_max=128, tk_max=128)
    out2 = jax.block_until_ready(logistic_reg_apply(x2, params2))
    ref2 = logistic_reg_ref(x2.astype(jnp.bfloat16).astype(jnp.float32),
                            w2.astype(jnp.bfloat16).astype(jnp.float32), b2)
    assert out2.shape == (B2, Out2)
    assert jnp.allclose(out2, ref2, atol=1e-4, rtol=1e-4)

    print("KERNEL_OK")
</pallas_src>

<mosaic_0001>
module attributes {stable_mosaic.version = 11 : i64} {
  func.func @_logreg_kernel_single_k(%arg0: i32, %arg1: i32, %arg2: memref<16x32xbf16, #tpu.memory_space<vmem>>, %arg3: memref<32x128xbf16, #tpu.memory_space<vmem>>, %arg4: memref<1x128xf32, #tpu.memory_space<vmem>>, %arg5: memref<16x128xf32, #tpu.memory_space<vmem>>) attributes {dimension_semantics = [#tpu.dimension_semantics<parallel>, #tpu.dimension_semantics<parallel>], iteration_bounds = array<i64: 1, 1>, scalar_prefetch = 0 : i64, scratch_operands = 0 : i64, tpu.core_type = #tpu.core_type<tc>, window_params = [{transform_indices = @transform_0, window_bounds = array<i64: 16, 32>}, {transform_indices = @transform_1, window_bounds = array<i64: 32, 128>}, {transform_indices = @transform_2, window_bounds = array<i64: 1, 128>}, {transform_indices = @transform_3, window_bounds = array<i64: 16, 128>}]} {
    %c0 = arith.constant 0 : index
    %c0_0 = arith.constant 0 : index
    %0 = vector.load %arg2[%c0, %c0_0] : memref<16x32xbf16, #tpu.memory_space<vmem>>, vector<16x32xbf16>
    %c0_1 = arith.constant 0 : index
    %c0_2 = arith.constant 0 : index
    %1 = vector.load %arg3[%c0_1, %c0_2] : memref<32x128xbf16, #tpu.memory_space<vmem>>, vector<32x128xbf16>
    %cst = arith.constant dense<0.000000e+00> : vector<16x128xf32>
    %2 = tpu.matmul %0, %1, %cst {dimension_numbers = #tpu.dot_dimension_numbers<[1], [0], [0], [1], [0, 0, 1, 1], [], []>} : vector<16x32xbf16>, vector<32x128xbf16>, vector<16x128xf32> -> vector<16x128xf32>
    %c0_3 = arith.constant 0 : index
    %c0_4 = arith.constant 0 : index
    %3 = vector.load %arg4[%c0_3, %c0_4] : memref<1x128xf32, #tpu.memory_space<vmem>>, vector<1x128xf32>
    %4 = vector.broadcast %3 : vector<1x128xf32> to vector<16x128xf32>
    %5 = arith.addf %2, %4 : vector<16x128xf32>
    %cst_5 = arith.constant 5.000000e-01 : f32
    %6 = vector.broadcast %cst_5 : f32 to vector<16x128xf32>
    %7 = arith.mulf %6, %5 : vector<16x128xf32>
    %8 = math.tanh %7 : vector<16x128xf32>
    %cst_6 = arith.constant 5.000000e-01 : f32
    %9 = vector.broadcast %cst_6 : f32 to vector<16x128xf32>
    %10 = arith.mulf %9, %8 : vector<16x128xf32>
    %cst_7 = arith.constant 5.000000e-01 : f32
    %11 = vector.broadcast %cst_7 : f32 to vector<16x128xf32>
    %12 = arith.addf %10, %11 : vector<16x128xf32>
    %c0_8 = arith.constant 0 : index
    %c0_9 = arith.constant 0 : index
    %13 = vector.load %arg5[%c0_8, %c0_9] : memref<16x128xf32, #tpu.memory_space<vmem>>, vector<16x128xf32>
    tpu.vector_store %arg5[%c0_8, %c0_9], %12 {strides = array<i32>} : memref<16x128xf32, #tpu.memory_space<vmem>>, vector<16x128xf32>,
    return
  }
  func.func @transform_0(%arg0: i32, %arg1: i32) -> (i32, i32) {
    %c0_i32 = arith.constant 0 : i32
    %c0_i32_0 = arith.constant 0 : i32
    return %arg0, %c0_i32 : i32, i32
  }
  func.func @transform_1(%arg0: i32, %arg1: i32) -> (i32, i32) {
    %c0_i32 = arith.constant 0 : i32
    %c0_i32_0 = arith.constant 0 : i32
    return %c0_i32, %arg1 : i32, i32
  }
  func.func @transform_2(%arg0: i32, %arg1: i32) -> (i32, i32) {
    %c0_i32 = arith.constant 0 : i32
    %c0_i32_0 = arith.constant 0 : i32
    return %c0_i32, %arg1 : i32, i32
  }
  func.func @transform_3(%arg0: i32, %arg1: i32) -> (i32, i32) {
    %c0_i32 = arith.constant 0 : i32
    return %arg0, %arg1 : i32, i32
  }
}

</mosaic_0001>

<llo_original>
// kernel: tpu_custom_call.1
$region0: #{tpu_custom_call.1}
  #allocation0 [shape = 'u32[]', space=smem, size = 0x4, offset = 0x4, fixed_abs, tag = 'smem constant byte address 0x4 - core index']
  #allocation1 [shape = 'u32[144,128]{1,0:T(1,128)}', space=vmem, size = 0x12000, scoped, tag = 'internal scratch']
  %s0 = inlined_call_operand.hbm [shape: bf16[16,32], index: 0, kind: input, shape index: {}]
  %s1 = inlined_call_operand.hbm [shape: bf16[32,128], index: 1, kind: input, shape index: {}]
  %s2 = inlined_call_operand.vmem [shape: f32[1,128], index: 2, kind: input, shape index: {}]
  %s3 = inlined_call_operand.hbm [shape: f32[16,128], index: 3, kind: output, shape index: {}]
  %s4 = sld [smem:[#allocation0]]
  $region30: #{tpu_custom_call.1} parent=0
    _
  %s6 = ssub.s32 1, %s4
  %s7 = scalar_select 0, %s6, %s4
  $region1: #{tpu_custom_call.1} parent=0
    #allocation2 [shape = 'u8[4096]{0}', space=vmem, size = 0x1000, scoped, tag = 'input window, operand 0, single buffered']
    #allocation3 [shape = 's32[1]{0}', space=sflag, size = 0x4, scoped, tag = 'scoped memory for tpu_custom_call.1']
    #allocation4 [shape = 's32[1]{0}', space=sflag, size = 0x4, scoped, tag = 'scoped memory for tpu_custom_call.1']
    #allocation5 [shape = 'u8[8192]{0}', space=vmem, size = 0x2000, scoped, tag = 'input window, operand 1, single buffered']
    #allocation6 [shape = 's32[1]{0}', space=sflag, size = 0x4, scoped, tag = 'scoped memory for tpu_custom_call.1']
    #allocation7 [shape = 'u8[8192]{0}', space=vmem, size = 0x2000, scoped, tag = 'output window, operand 0, single buffered']
    %8 = vsyncpa [#allocation3], 0
    %9 = vsyncpa [#allocation6], 0
    %10 = vsyncpa [#allocation4], 0
    // Predicated region
    $region2: #{tpu_custom_call.1} parent=1 // pred_check
      _
    $region3: #{tpu_custom_call.1} parent=1 // pred_check_branch
      %12 = sbr.rel (0) target = $region5
    $region4: #{tpu_custom_call.1} parent=1 // pred_region
      %s14 = ssub.s32 128, 128
      %15 = vsyncadd [#allocation3], %s14
      %s16 = sshll.u32 [#allocation2], 4
      %s17 = int_to_ptr.vmem [resolvable:$true] %s16
      %22 = dma.hbm_to_vmem [thread:$0]  %s0, 128, %s17, [#allocation3], 64, 64, 4
    $region5: #{tpu_custom_call.1} parent=1 // pred_fallthru
      _
    // Predicated region
    $region6: #{tpu_custom_call.1} parent=1 // pred_check
      _
    $region7: #{tpu_custom_call.1} parent=1 // pred_check_branch
      %24 = sbr.rel (0) target = $region9
    $region8: #{tpu_custom_call.1} parent=1 // pred_region
      %s26 = ssub.s32 256, 256
      %27 = vsyncadd [#allocation6], %s26
      %s28 = sshll.u32 [#allocation5], 4
      %s29 = int_to_ptr.vmem [resolvable:$true] %s28
      %34 = dma.hbm_to_vmem [thread:$0]  %s1, 256, %s29, [#allocation6], 64, 64, 4
    $region9: #{tpu_custom_call.1} parent=1 // pred_fallthru
      _
    // Predicated region
    $region10: #{tpu_custom_call.1} parent=1 // pred_check
      _
    $region11: #{tpu_custom_call.1} parent=1 // pred_check_branch
      %36 = sbr.rel (0) target = $region13
    $region12: #{tpu_custom_call.1} parent=1 // pred_region
      _
    $region13: #{tpu_custom_call.1} parent=1 // pred_fallthru
      _
    // Predicated region
    $region14: #{tpu_custom_call.1} parent=1 // pred_check
      _
    $region15: #{tpu_custom_call.1} parent=1 // pred_check_branch
      %38 = sbr.rel (0) target = $region17
    $region16: #{tpu_custom_call.1} parent=1 // pred_region
      %39 = dma.done [#allocation3], 128
    $region17: #{tpu_custom_call.1} parent=1 // pred_fallthru
      _
    // Predicated region
    $region18: #{tpu_custom_call.1} parent=1 // pred_check
      _
    $region19: #{tpu_custom_call.1} parent=1 // pred_check_branch
      %41 = sbr.rel (0) target = $region21
    $region20: #{tpu_custom_call.1} parent=1 // pred_region
      %42 = dma.done [#allocation6], 256
    $region21: #{tpu_custom_call.1} parent=1 // pred_fallthru
      _
    %v44 = vld [vmem:[#allocation2] sm:$0xf]
    %v45 = vld [vmem:[#allocation2 + $0x4] sm:$0xf]
    %v46 = vld [vmem:[#allocation5] sm:$0xf]
    %v47 = vld [vmem:[#allocation5 + $0x4] sm:$0xf]
    %v48 = vld [vmem:[#allocation5 + $0x8] sm:$0xf]
    %v49 = vld [vmem:[#allocation5 + $0xc] sm:$0xf]
    %v50 = vld [vmem:[%s2] sm:$0x1]
    %v52 = vlaneseq
    %v53 = vshrl.u32 %v52, 7
    %v54 = vsub.s32 0, %v53
    %v55 = vrot.slane %v50, %v54
    %v59 = vunpack.c.l.b16 %v44
    %v60 = vunpack.c.l.b16 %v45
    %v61 = vpack.c.b16 %v60, %v59
    %v66 = vunpack.c.l.b16 %v46
    %v67 = vunpack.c.l.b16 %v47
    %v68 = vunpack.c.l.b16 %v48
    %v69 = vunpack.c.l.b16 %v49
    %v70 = vpack.c.b16 %v67, %v66
    %v71 = vpack.c.b16 %v69, %v68
    %vm74 = vcmask 261120
    %v76 = vsel %vm74, %v61, 0
    %78 = vmatprep.subr.bf16.mxu0 0
    %79 = vmatpush1.bf16.msra.mxu0 %v70
    %80 = vmatprep.subr.bf16.mxu0 0
    %81 = vmatpush1.bf16.msra.mxu0 %v71
    %82 = vmatprep.subr.bf16.mxu0 0
    %83 = vmatpush1.bf16.msra.mxu0 0
    %84 = vmatprep.subr.bf16.mxu0 0
    %85 = vmatpush1.bf16.msra.mxu0 0
    %86 = vmatprep.subr.bf16.mxu0 0
    %87 = vmatpush1.bf16.msra.mxu0 0
    %88 = vmatprep.subr.bf16.mxu0 0
    %89 = vmatpush1.bf16.msra.mxu0 0
    %90 = vmatprep.subr.bf16.mxu0 0
    %91 = vmatpush1.bf16.msra.mxu0 0
    %92 = vmatprep.subr.bf16.mxu0 0
    %93 = vmatpush1.bf16.msra.mxu0 0
    %94 = vmatprep.subr.bf16.mxu0 0
    %95 = vmatpush1.bf16.msra.mxu0 0
    %96 = vmatprep.subr.bf16.mxu0 0
    %97 = vmatpush1.bf16.msra.mxu0 0
    %98 = vmatprep.subr.bf16.mxu0 0
    %99 = vmatpush1.bf16.msra.mxu0 0
    %100 = vmatprep.subr.bf16.mxu0 0
    %101 = vmatpush1.bf16.msra.mxu0 0
    %102 = vmatprep.subr.bf16.mxu0 0
    %103 = vmatpush1.bf16.msra.mxu0 0
    %104 = vmatprep.subr.bf16.mxu0 0
    %105 = vmatpush1.bf16.msra.mxu0 0
    %106 = vmatprep.subr.bf16.mxu0 0
    %107 = vmatpush1.bf16.msra.mxu0 0
    %108 = vmatprep.subr.bf16.mxu0 0
    %109 = vmatpush1.bf16.msra.mxu0 0
    %110 = vmatprep.mubr.bf16.mxu0 0
    %111 = vmatmul.mubr.bf16.gmra.mrb[0].mxu0 %v76
    %v112 = vpop.f32.mrb[0].mxu0
    %v113 = vadd.f32 %v55, %v112
    %v114 = vpop.f32.mrb[0].mxu0
    %v115 = vpop.f32.mrb[0].mxu0
    %v116 = vadd.f32 %v55, %v115
    %v117 = vpop.f32.mrb[0].mxu0
    %118 = vdwg.mxu0
    %v119 = vmul.f32 %v113, 0.5
    %v120 = vmul.f32 %v116, 0.5
    %v121 = vtanh.pop %v119
    %v122 = vtanh.pop %v120
    %v123 = vmul.f32 %v121, 0.5
    %v124 = vmul.f32 %v122, 0.5
    %v125 = vadd.f32 %v123, 0.5
    %v126 = vadd.f32 %v124, 0.5
    %127 = vst [vmem:[#allocation7] sm:$0xff] %v125
    %128 = vst [vmem:[#allocation7 + $0x8] sm:$0xff] %v126
    // Predicated region
    $region22: #{tpu_custom_call.1} parent=1 // pred_check
      _
    $region23: #{tpu_custom_call.1} parent=1 // pred_check_branch
      %130 = sbr.rel (0) target = $region25
    $region24: #{tpu_custom_call.1} parent=1 // pred_region
      %s132 = ssub.s32 256, 256
      %133 = vsyncadd [#allocation4], %s132
      %s134 = sshll.u32 [#allocation7], 4
      %s135 = int_to_ptr.vmem [resolvable:$true] %s134
      %140 = dma.vmem_to_hbm [thread:$0]  %s135, 256, %s3, [#allocation4], 128, 128, 8
    $region25: #{tpu_custom_call.1} parent=1 // pred_fallthru
      _
    // Predicated region
    $region26: #{tpu_custom_call.1} parent=1 // pred_check
      _
    $region27: #{tpu_custom_call.1} parent=1 // pred_check_branch
      %142 = sbr.rel (0) target = $region29
    $region28: #{tpu_custom_call.1} parent=1 // pred_region
      %143 = dma.done [#allocation4], 256
    $region29: #{tpu_custom_call.1} parent=1 // pred_fallthru
      _
    %144 = vsyncpa [#allocation3], 1
    %145 = vsyncpa [#allocation6], 1
    %146 = vsyncpa [#allocation4], 1

</llo_original>
